<compile_context>
chip_gen: v7x
topology: tpu7x:2x2x1
jax: 0.10.0
libtpu: 0.0.40
codegen_flags: <defaults>
</compile_context>

<pallas_src>
import functools

import jax
import jax.numpy as jnp
from jax.experimental import pallas as pl
from jax.experimental.pallas import tpu as pltpu

_VMEM_LIMIT = 32 * 1024 * 1024      # raise v5e's 16 MiB default scoped VMEM
_BLOCK_BUDGET = 20 * 1024 * 1024    # double-buffered per-step block budget (v7x safe)


def _round_up(x, m):
    return ((x + m - 1) // m) * m


def _batch_tile(B):
    """Batch tile: >= 2 grid steps when B > 8 (v7x megacore), <= 512 rows."""
    return max(8, min(512, _round_up(-(-B // 2), 8)))


# ---------------------------------------------------------------------------
# Kernels
# ---------------------------------------------------------------------------
def _single_matmul_kernel(x_ref, w_ref, o_ref):
    """One lane-dense real matmul: (TB, Kpad) @ (Kpad, Npad) -> (TB, Npad)."""
    o_ref[...] = jnp.dot(x_ref[...], w_ref[...],
                         preferred_element_type=jnp.float32)


def _grouped_mode_kernel(x_ref, w_ref, o_ref, *, G):
    """G per-mode matmuls (TB,K)@(K,Nc_p), packed lane-dense into (TB, G*Nc_p).

    x_ref: (G, TB, K)   w_ref: (G, K, Nc_p)   o_ref: (TB, G*Nc_p)
    """
    outs = [jnp.dot(x_ref[g], w_ref[g], preferred_element_type=jnp.float32)
            for g in range(G)]
    o_ref[...] = outs[0] if G == 1 else jnp.concatenate(outs, axis=-1)


# ---------------------------------------------------------------------------
# Packing helpers (mode-truncated data only -- tiny vs. the FFT itself)
# ---------------------------------------------------------------------------
def _pack_modes(x_ft, modes1):
    """(B, Cin, n_freq) complex -> (B, M, 2*Cin) real, [Re | Im] on last axis."""
    xk = x_ft[:, :, :modes1]                               # (B, Cin, M)
    xr = jnp.transpose(jnp.real(xk), (0, 2, 1))            # (B, M, Cin)
    xi = jnp.transpose(jnp.imag(xk), (0, 2, 1))            # (B, M, Cin)
    return jnp.concatenate([xr, xi], axis=-1).astype(jnp.float32)


def _pack_weight_blocks(w_real, w_imag):
    """(Cin, Cout, M) -> (M, 2*Cin, 2*Cout) real block [[wr, wi], [-wi, wr]]."""
    wr = jnp.transpose(w_real, (2, 0, 1)).astype(jnp.float32)   # (M, Cin, Cout)
    wi = jnp.transpose(w_imag, (2, 0, 1)).astype(jnp.float32)
    top = jnp.concatenate([wr, wi], axis=-1)                    # (M, Cin, 2Cout)
    bot = jnp.concatenate([-wi, wr], axis=-1)                   # (M, Cin, 2Cout)
    return jnp.concatenate([top, bot], axis=1)                  # (M, 2Cin, 2Cout)


def _block_diag_weight(w_blocks, M, K, Nc):
    """(M, K, Nc) -> (M*K, M*Nc) block-diagonal slab via a diagonal scatter
    (no dense M x M eye outer-product).  Weight-only; hoistable by callers."""
    idx = jnp.arange(M)
    w4 = jnp.zeros((M, K, M, Nc), jnp.float32).at[idx, :, idx, :].set(w_blocks)
    return w4.reshape(M * K, M * Nc)


# ---------------------------------------------------------------------------
# Mode-mixing paths
# ---------------------------------------------------------------------------
def _mix_blockdiag(xp, w_blocks, B, M, K, Nc, use_bf16):
    """Fold all M modes into one lane-dense matmul (small-M, small-channel)."""
    Kbd, Nbd = M * K, M * Nc
    Kpad = _round_up(Kbd, 128)      # lane-dense contraction dim
    Npad = _round_up(Nbd, 128)      # lane-dense output (unmasked vst)
    TB = _batch_tile(B)
    B_pad = _round_up(B, TB)

    x_pack = xp.reshape(B, Kbd)
    x_pack = jnp.pad(x_pack, ((0, B_pad - B), (0, Kpad - Kbd)))
    w_bd = _block_diag_weight(w_blocks, M, K, Nc)
    w_bd = jnp.pad(w_bd, ((0, Kpad - Kbd), (0, Npad - Nbd)))

    if use_bf16:
        x_pack = x_pack.astype(jnp.bfloat16)
        w_bd = w_bd.astype(jnp.bfloat16)

    cost = pl.CostEstimate(
        flops=2 * B_pad * Kpad * Npad,
        transcendentals=0,
        bytes_accessed=4 * (B_pad * Kpad + Kpad * Npad + B_pad * Npad))

    out = pl.pallas_call(
        _single_matmul_kernel,
        out_shape=jax.ShapeDtypeStruct((B_pad, Npad), jnp.float32),
        grid_spec=pltpu.PrefetchScalarGridSpec(
            num_scalar_prefetch=0,
            grid=(B_pad // TB,),
            in_specs=[pl.BlockSpec((TB, Kpad), lambda i: (i, 0)),
                      pl.BlockSpec((Kpad, Npad), lambda i: (0, 0))],
            out_specs=pl.BlockSpec((TB, Npad), lambda i: (i, 0)),
        ),
        compiler_params=pltpu.CompilerParams(
            dimension_semantics=("parallel",),
            vmem_limit_bytes=_VMEM_LIMIT),
        cost_estimate=cost,
    )(x_pack, w_bd)

    return out[:B, :Nbd].reshape(B, M, Nc)


def _mix_grouped(xp, w_blocks, B, M, K, Nc, use_bf16):
    """Grouped per-mode path: G modes per grid step, lane-dense packed output."""
    elem = 2 if use_bf16 else 4

    # Per-mode output lane width: power of two (divides 128), or mult of 128.
    if Nc <= 128:
        Nc_p = max(8, pl.next_power_of_2(Nc))
        g_unit = 128 // Nc_p        # smallest G giving 128-lane output blocks
    else:
        Nc_p = _round_up(Nc, 128)
        g_unit = 1

    TB = _batch_tile(B)

    def budget(tb, g):              # double-buffered x / w / out blocks (bytes)
        return 2 * (elem * g * tb * K + elem * g * K * Nc_p + 4 * tb * g * Nc_p)

    if M <= g_unit:
        G = M                       # one group spans the full mode axis (legal
                                    # block: last dim equals full array dim)
    else:
        G = g_unit
        # Grow G (x2) up to 16 modes/step to amortize the ~0.35us grid-step
        # overhead, while per-step blocks stay inside the VMEM budget.
        while 2 * G <= 16 and 2 * G <= M and budget(TB, 2 * G) <= _BLOCK_BUDGET:
            G *= 2
    while TB > 8 and budget(TB, G) > _BLOCK_BUDGET:
        TB = max(8, (TB // 2) // 8 * 8)

    Mg = _round_up(M, G)
    B_pad = _round_up(B, TB)

    x_mb = jnp.transpose(xp, (1, 0, 2))                           # (M, B, K)
    x_mb = jnp.pad(x_mb, ((0, Mg - M), (0, B_pad - B), (0, 0)))
    w_pad = jnp.pad(w_blocks, ((0, Mg - M), (0, 0), (0, Nc_p - Nc)))

    if use_bf16:
        x_mb = x_mb.astype(jnp.bfloat16)
        w_pad = w_pad.astype(jnp.bfloat16)

    cost = pl.CostEstimate(
        flops=2 * B_pad * Mg * K * Nc_p,
        transcendentals=0,
        bytes_accessed=4 * (Mg * B_pad * K + Mg * K * Nc_p + B_pad * Mg * Nc_p))

    kernel = functools.partial(_grouped_mode_kernel, G=G)

    out = pl.pallas_call(
        kernel,
        out_shape=jax.ShapeDtypeStruct((B_pad, Mg * Nc_p), jnp.float32),
        grid_spec=pltpu.PrefetchScalarGridSpec(
            num_scalar_prefetch=0,
            grid=(Mg // G, B_pad // TB),      # batch innermost: weight block
            in_specs=[                         # index is constant across it
                pl.BlockSpec((G, TB, K), lambda g, b: (g, b, 0)),
                pl.BlockSpec((G, K, Nc_p), lambda g, b: (g, 0, 0))],
            out_specs=pl.BlockSpec((TB, G * Nc_p), lambda g, b: (b, g)),
        ),
        compiler_params=pltpu.CompilerParams(
            dimension_semantics=("parallel", "parallel"),
            vmem_limit_bytes=_VMEM_LIMIT),
        cost_estimate=cost,
    )(x_mb, w_pad)

    return out.reshape(B_pad, Mg, Nc_p)[:B, :M, :Nc]


# ---------------------------------------------------------------------------
# Forward pass
# ---------------------------------------------------------------------------
def spectral_conv1d(x, w_real, w_imag, modes1, use_bf16=False):
    """SpectralConv1d forward.

    x      : (B, Cin, N)  float32
    w_real : (Cin, Cout, modes1) float32 (real part of cfloat weights)
    w_imag : (Cin, Cout, modes1) float32 (imag part of cfloat weights)
    use_bf16: cast MXU inputs to bf16 (f32 accumulation); off by default to
              match the f32 reference at tight tolerance.
    returns: (B, Cout, N) float32
    """
    B, Cin, N = x.shape
    Cout = w_real.shape[1]
    n_freq = N // 2 + 1
    assert modes1 <= n_freq, "modes1 must not exceed N//2 + 1"
    M = modes1
    K, Nc = 2 * Cin, 2 * Cout

    # ---- FFT (glue) ----
    x_ft = jnp.fft.rfft(x, axis=-1)                  # (B, Cin, n_freq)

    # ---- pack & mix (Pallas) ----
    xp = _pack_modes(x_ft, M)                        # (B, M, 2Cin)
    w_blocks = _pack_weight_blocks(w_real, w_imag)   # (M, 2Cin, 2Cout)

    # Block-diag path does M-fold extra (zero) MXU work -> only for small M
    # and small slabs (latency-bound); otherwise grouped per-mode path.
    if M <= 16 and M * K <= 1024 and M * Nc <= 1024:
        out_pack = _mix_blockdiag(xp, w_blocks, B, M, K, Nc, use_bf16)
    else:
        out_pack = _mix_grouped(xp, w_blocks, B, M, K, Nc, use_bf16)

    # ---- unpack, pad spectrum (fused pad, no zeros+scatter), inverse FFT ----
    out_k = (out_pack[..., :Cout] + 1j * out_pack[..., Cout:]).astype(jnp.complex64)
    out_k = jnp.transpose(out_k, (0, 2, 1))          # (B, Cout, M)
    out_ft = jnp.pad(out_k, ((0, 0), (0, 0), (0, n_freq - M)))
    return jnp.fft.irfft(out_ft, n=N, axis=-1).astype(jnp.float32)


# ---------------------------------------------------------------------------
# Pure-JAX reference mirroring the PyTorch forward
# ---------------------------------------------------------------------------
def _reference(x, w_real, w_imag, modes1):
    B, Cin, N = x.shape
    Cout = w_real.shape[1]
    w = (w_real + 1j * w_imag).astype(jnp.complex64)
    x_ft = jnp.fft.rfft(x, axis=-1)
    mixed = jnp.einsum('bix,iox->box', x_ft[:, :, :modes1], w)
    out_ft = jnp.zeros((B, Cout, N // 2 + 1), dtype=jnp.complex64)
    out_ft = out_ft.at[:, :, :modes1].set(mixed)
    return jnp.fft.irfft(out_ft, n=N, axis=-1)


if __name__ == "__main__":
    key = jax.random.PRNGKey(0)

    def make_case(k, batch, cin, cout, modes1, n):
        kx, kwr, kwi = jax.random.split(k, 3)
        scale = 1.0 / (cin * cout)
        x = jax.random.normal(kx, (batch, cin, n), dtype=jnp.float32)
        w_real = scale * jax.random.uniform(kwr, (cin, cout, modes1),
                                            dtype=jnp.float32)
        w_imag = scale * jax.random.uniform(kwi, (cin, cout, modes1),
                                            dtype=jnp.float32)
        return x, w_real, w_imag

    k1, k2 = jax.random.split(key)

    # Case 1: SpectralConv1d(4, 4, modes1=4), N=16  -> block-diagonal path.
    x, wr, wi = make_case(k1, batch=2, cin=4, cout=4, modes1=4, n=16)
    out = jax.block_until_ready(spectral_conv1d(x, wr, wi, 4))
    ref = jax.block_until_ready(_reference(x, wr, wi, 4))
    assert out.shape == (2, 4, 16), out.shape
    assert jnp.allclose(out, ref, atol=1e-5, rtol=1e-5), "blockdiag path mismatch"

    # Case 2: SpectralConv1d(8, 8, modes1=20), N=64 -> grouped per-mode path.
    x, wr, wi = make_case(k2, batch=4, cin=8, cout=8, modes1=20, n=64)
    out = jax.block_until_ready(spectral_conv1d(x, wr, wi, 20))
    ref = jax.block_until_ready(_reference(x, wr, wi, 20))
    assert out.shape == (4, 8, 64), out.shape
    assert jnp.allclose(out, ref, atol=1e-5, rtol=1e-5), "grouped path mismatch"

    print("KERNEL_OK")
</pallas_src>

<mosaic_0001>
module attributes {stable_mosaic.version = 11 : i64} {
  func.func @_single_matmul_kernel(%arg0: i32, %arg1: memref<8x128xf32, #tpu.memory_space<vmem>>, %arg2: memref<128x128xf32, #tpu.memory_space<vmem>>, %arg3: memref<8x128xf32, #tpu.memory_space<vmem>>) attributes {dimension_semantics = [#tpu.dimension_semantics<parallel>], iteration_bounds = array<i64: 1>, scalar_prefetch = 0 : i64, scratch_operands = 0 : i64, tpu.core_type = #tpu.core_type<tc>, window_params = [{transform_indices = @transform_0, window_bounds = array<i64: 8, 128>}, {pipeline_mode = #tpu.pipeline_mode<synchronous>, transform_indices = @transform_1, window_bounds = array<i64: 128, 128>}, {transform_indices = @transform_2, window_bounds = array<i64: 8, 128>}]} {
    %c0 = arith.constant 0 : index
    %c0_0 = arith.constant 0 : index
    %0 = vector.load %arg1[%c0, %c0_0] : memref<8x128xf32, #tpu.memory_space<vmem>>, vector<8x128xf32>
    %c0_1 = arith.constant 0 : index
    %c0_2 = arith.constant 0 : index
    %1 = vector.load %arg2[%c0_1, %c0_2] : memref<128x128xf32, #tpu.memory_space<vmem>>, vector<128x128xf32>
    %cst = arith.constant dense<0.000000e+00> : vector<8x128xf32>
    %2 = tpu.matmul %0, %1, %cst {dimension_numbers = #tpu.dot_dimension_numbers<[1], [0], [0], [1], [0, 0, 1, 1], [], []>} : vector<8x128xf32>, vector<128x128xf32>, vector<8x128xf32> -> vector<8x128xf32>
    %c0_3 = arith.constant 0 : index
    %c0_4 = arith.constant 0 : index
    %3 = vector.load %arg3[%c0_3, %c0_4] : memref<8x128xf32, #tpu.memory_space<vmem>>, vector<8x128xf32>
    tpu.vector_store %arg3[%c0_3, %c0_4], %2 {strides = array<i32>} : memref<8x128xf32, #tpu.memory_space<vmem>>, vector<8x128xf32>,
    return
  }
  func.func @transform_0(%arg0: i32) -> (i32, i32) {
    %c0_i32 = arith.constant 0 : i32
    %c0_i32_0 = arith.constant 0 : i32
    return %arg0, %c0_i32 : i32, i32
  }
  func.func @transform_1(%arg0: i32) -> (i32, i32) {
    %c0_i32 = arith.constant 0 : i32
    %c0_i32_0 = arith.constant 0 : i32
    %c0_i32_1 = arith.constant 0 : i32
    return %c0_i32, %c0_i32_0 : i32, i32
  }
  func.func @transform_2(%arg0: i32) -> (i32, i32) {
    %c0_i32 = arith.constant 0 : i32
    %c0_i32_0 = arith.constant 0 : i32
    return %arg0, %c0_i32 : i32, i32
  }
}

</mosaic_0001>

<llo_original>
// kernel: tpu_custom_call.1
$region0: #{tpu_custom_call.1}
  #allocation0 [shape = 'u32[]', space=smem, size = 0x4, offset = 0x4, fixed_abs, tag = 'smem constant byte address 0x4 - core index']
  #allocation1 [shape = 'u32[144,128]{1,0:T(1,128)}', space=vmem, size = 0x12000, scoped, tag = 'internal scratch']
  %s0 = inlined_call_operand.hbm [shape: f32[8,128], index: 0, kind: input, shape index: {}]
  %s1 = inlined_call_operand.hbm [shape: f32[128,128], index: 1, kind: input, shape index: {}]
  %s2 = inlined_call_operand.hbm [shape: f32[8,128], index: 2, kind: output, shape index: {}]
  %s3 = sld [smem:[#allocation0]]
  $region26: #{tpu_custom_call.1} parent=0
    _
  %s5 = ssub.s32 1, %s3
  %s6 = scalar_select 0, %s5, %s3
  $region1: #{tpu_custom_call.1} parent=0
    #allocation2 [shape = 'u8[4096]{0}', space=vmem, size = 0x1000, scoped, tag = 'input window, operand 0, single buffered']
    #allocation3 [shape = 's32[1]{0}', space=sflag, size = 0x4, scoped, tag = 'scoped memory for tpu_custom_call.1']
    #allocation4 [shape = 's32[1]{0}', space=sflag, size = 0x4, scoped, tag = 'scoped memory for tpu_custom_call.1']
    #allocation5 [shape = 'u8[65536]{0}', space=vmem, size = 0x10000, scoped, tag = 'input window, operand 1, single buffered']
    #allocation6 [shape = 's32[1]{0}', space=sflag, size = 0x4, scoped, tag = 'scoped memory for tpu_custom_call.1']
    #allocation7 [shape = 'u8[4096]{0}', space=vmem, size = 0x1000, scoped, tag = 'output window, operand 0, single buffered']
    %7 = vsyncpa [#allocation3], 0
    %8 = vsyncpa [#allocation6], 0
    %9 = vsyncpa [#allocation4], 0
    // Predicated region
    $region2: #{tpu_custom_call.1} parent=1 // pred_check
      _
    $region3: #{tpu_custom_call.1} parent=1 // pred_check_branch
      %11 = sbr.rel (0) target = $region5
    $region4: #{tpu_custom_call.1} parent=1 // pred_region
      %s13 = ssub.s32 128, 128
      %14 = vsyncadd [#allocation3], %s13
      %s16 = sshll.u32 [#allocation2], 4
      %s17 = int_to_ptr.vmem [resolvable:$true] %s16
      %19 = dma.hbm_to_vmem [thread:$0]  %s0, 128, %s17, [#allocation3]
    $region5: #{tpu_custom_call.1} parent=1 // pred_fallthru
      _
    // Predicated region
    $region6: #{tpu_custom_call.1} parent=1 // pred_check
      _
    $region7: #{tpu_custom_call.1} parent=1 // pred_check_branch
      %21 = sbr.rel (0) target = $region9
    $region8: #{tpu_custom_call.1} parent=1 // pred_region
      %s23 = ssub.s32 2048, 2048
      %24 = vsyncadd [#allocation6], %s23
      %s25 = sshll.u32 [#allocation5], 4
      %s26 = int_to_ptr.vmem [resolvable:$true] %s25
      %31 = dma.hbm_to_vmem [thread:$0]  %s1, 2048, %s26, [#allocation6], 128, 128, 8
    $region9: #{tpu_custom_call.1} parent=1 // pred_fallthru
      _
    // Predicated region
    $region10: #{tpu_custom_call.1} parent=1 // pred_check
      _
    $region11: #{tpu_custom_call.1} parent=1 // pred_check_branch
      %33 = sbr.rel (0) target = $region13
    $region12: #{tpu_custom_call.1} parent=1 // pred_region
      %34 = dma.done [#allocation3], 128
    $region13: #{tpu_custom_call.1} parent=1 // pred_fallthru
      _
    // Predicated region
    $region14: #{tpu_custom_call.1} parent=1 // pred_check
      _
    $region15: #{tpu_custom_call.1} parent=1 // pred_check_branch
      %36 = sbr.rel (0) target = $region17
    $region16: #{tpu_custom_call.1} parent=1 // pred_region
      %37 = dma.done [#allocation6], 2048
    $region17: #{tpu_custom_call.1} parent=1 // pred_fallthru
      _
    %v38 = vld [vmem:[#allocation2] sm:$0xff]
    %v39 = vld [vmem:[#allocation5] sm:$0xff]
    %v40 = vld [vmem:[#allocation5 + $0x8] sm:$0xff]
    %v41 = vld [vmem:[#allocation5 + $0x10] sm:$0xff]
    %v42 = vld [vmem:[#allocation5 + $0x18] sm:$0xff]
    %v43 = vld [vmem:[#allocation5 + $0x20] sm:$0xff]
    %v44 = vld [vmem:[#allocation5 + $0x28] sm:$0xff]
    %v45 = vld [vmem:[#allocation5 + $0x30] sm:$0xff]
    %v46 = vld [vmem:[#allocation5 + $0x38] sm:$0xff]
    %v47 = vld [vmem:[#allocation5 + $0x40] sm:$0xff]
    %v48 = vld [vmem:[#allocation5 + $0x48] sm:$0xff]
    %v49 = vld [vmem:[#allocation5 + $0x50] sm:$0xff]
    %v50 = vld [vmem:[#allocation5 + $0x58] sm:$0xff]
    %v51 = vld [vmem:[#allocation5 + $0x60] sm:$0xff]
    %v52 = vld [vmem:[#allocation5 + $0x68] sm:$0xff]
    %v53 = vld [vmem:[#allocation5 + $0x70] sm:$0xff]
    %v54 = vld [vmem:[#allocation5 + $0x78] sm:$0xff]
    %55 = vmatprep.subr.mxu0 0.0
    %56 = vmatpush1.msra.mxu0 %v39
    %57 = vmatprep.subr.mxu0 0.0
    %58 = vmatpush1.msra.mxu0 %v40
    %59 = vmatprep.subr.mxu0 0.0
    %60 = vmatpush1.msra.mxu0 %v41
    %61 = vmatprep.subr.mxu0 0.0
    %62 = vmatpush1.msra.mxu0 %v42
    %63 = vmatprep.subr.mxu0 0.0
    %64 = vmatpush1.msra.mxu0 %v43
    %65 = vmatprep.subr.mxu0 0.0
    %66 = vmatpush1.msra.mxu0 %v44
    %67 = vmatprep.subr.mxu0 0.0
    %68 = vmatpush1.msra.mxu0 %v45
    %69 = vmatprep.subr.mxu0 0.0
    %70 = vmatpush1.msra.mxu0 %v46
    %71 = vmatprep.subr.mxu0 0.0
    %72 = vmatpush1.msra.mxu0 %v47
    %73 = vmatprep.subr.mxu0 0.0
    %74 = vmatpush1.msra.mxu0 %v48
    %75 = vmatprep.subr.mxu0 0.0
    %76 = vmatpush1.msra.mxu0 %v49
    %77 = vmatprep.subr.mxu0 0.0
    %78 = vmatpush1.msra.mxu0 %v50
    %79 = vmatprep.subr.mxu0 0.0
    %80 = vmatpush1.msra.mxu0 %v51
    %81 = vmatprep.subr.mxu0 0.0
    %82 = vmatpush1.msra.mxu0 %v52
    %83 = vmatprep.subr.mxu0 0.0
    %84 = vmatpush1.msra.mxu0 %v53
    %85 = vmatprep.subr.mxu0 0.0
    %86 = vmatpush1.msra.mxu0 %v54
    %87 = vmatprep.subr.mxu0 0.0
    %88 = vmatpush1.msra.mxu0 0.0
    %89 = vmatprep.subr.mxu0 0.0
    %90 = vmatpush1.msra.mxu0 0.0
    %91 = vmatprep.subr.mxu0 0.0
    %92 = vmatpush1.msra.mxu0 0.0
    %93 = vmatprep.subr.mxu0 0.0
    %94 = vmatpush1.msra.mxu0 0.0
    %95 = vmatprep.subr.mxu0 0.0
    %96 = vmatpush1.msra.mxu0 0.0
    %97 = vmatprep.subr.mxu0 0.0
    %98 = vmatpush1.msra.mxu0 0.0
    %99 = vmatprep.subr.mxu0 0.0
    %100 = vmatpush1.msra.mxu0 0.0
    %101 = vmatprep.subr.mxu0 0.0
    %102 = vmatpush1.msra.mxu0 0.0
    %103 = vmatprep.subr.mxu0 0.0
    %104 = vmatpush1.msra.mxu0 0.0
    %105 = vmatprep.subr.mxu0 0.0
    %106 = vmatpush1.msra.mxu0 0.0
    %107 = vmatprep.subr.mxu0 0.0
    %108 = vmatpush1.msra.mxu0 0.0
    %109 = vmatprep.subr.mxu0 0.0
    %110 = vmatpush1.msra.mxu0 0.0
    %111 = vmatprep.subr.mxu0 0.0
    %112 = vmatpush1.msra.mxu0 0.0
    %113 = vmatprep.subr.mxu0 0.0
    %114 = vmatpush1.msra.mxu0 0.0
    %115 = vmatprep.subr.mxu0 0.0
    %116 = vmatpush1.msra.mxu0 0.0
    %117 = vmatprep.subr.mxu0 0.0
    %118 = vmatpush1.msra.mxu0 0.0
    %119 = vmatprep.mubr.f32.mxu0 0.0
    %120 = vmatmul.mubr.f32.gmra.mrb[0].mxu0 %v38
    %v121 = vpop.f32.mrb[0].mxu0
    %v122 = vadd.f32 0.0, %v121
    %v123 = vpop.f32.mrb[0].mxu0
    %124 = vdwg.mxu0
    %125 = vst [vmem:[#allocation7] sm:$0xff] %v122
    // Predicated region
    $region18: #{tpu_custom_call.1} parent=1 // pred_check
      _
    $region19: #{tpu_custom_call.1} parent=1 // pred_check_branch
      %127 = sbr.rel (0) target = $region21
    $region20: #{tpu_custom_call.1} parent=1 // pred_region
      %s129 = ssub.s32 128, 128
      %130 = vsyncadd [#allocation4], %s129
      %s132 = sshll.u32 [#allocation7], 4
      %s133 = int_to_ptr.vmem [resolvable:$true] %s132
      %135 = dma.vmem_to_hbm [thread:$0]  %s133, 128, %s2, [#allocation4]
    $region21: #{tpu_custom_call.1} parent=1 // pred_fallthru
      _
    // Predicated region
    $region22: #{tpu_custom_call.1} parent=1 // pred_check
      _
    $region23: #{tpu_custom_call.1} parent=1 // pred_check_branch
      %137 = sbr.rel (0) target = $region25
    $region24: #{tpu_custom_call.1} parent=1 // pred_region
      %138 = dma.done [#allocation4], 128
    $region25: #{tpu_custom_call.1} parent=1 // pred_fallthru
      _
    %139 = vsyncpa [#allocation3], 1
    %140 = vsyncpa [#allocation6], 1
    %141 = vsyncpa [#allocation4], 1

</llo_original>
